<compile_context>
chip_gen: v6e
topology: v6e:2x2x1
jax: 0.10.0
libtpu: 0.0.40
codegen_flags: <defaults>
</compile_context>

<pallas_src>
import math
from functools import partial

import jax
import jax.numpy as jnp
from jax import lax
from jax.experimental import pallas as pl
from jax.experimental.pallas import tpu as pltpu


def _round_up(x, m):
    return ((x + m - 1) // m) * m


def _arc_margin_kernel(f_ref, w_ref, o_ref, *, k, eps):
    # f_ref: (B_pad, in)      raw features (same block every tile -> DMA'd once)
    # w_ref: (k, tile_n, in)  raw weights for this class tile; sub-center j is a
    #                         contiguous (tile_n, in) slab
    # o_ref: (B_pad, tile_n)
    f = f_ref[...].astype(jnp.float32)
    # F.normalize: x / max(||x||, eps) == x * rsqrt(max(sum(x*x), eps^2))
    f_inv = lax.rsqrt(
        jnp.maximum(jnp.sum(f * f, axis=-1, keepdims=True), eps * eps))
    fn = f * f_inv

    # bf16 weights -> feed the MXU bf16 operands, accumulate f32; else pure f32.
    mxu_dtype = jnp.bfloat16 if w_ref.dtype == jnp.bfloat16 else jnp.float32
    lhs = fn.astype(mxu_dtype)

    acc = None
    for j in range(k):  # k is tiny (e.g. 3) -> static unrolled loop
        w = w_ref[j].astype(jnp.float32)
        w_inv = lax.rsqrt(
            jnp.maximum(jnp.sum(w * w, axis=-1, keepdims=True), eps * eps))
        rhs = (w * w_inv).astype(mxu_dtype)
        c = lax.dot_general(
            lhs, rhs,
            dimension_numbers=(((1,), (1,)), ((), ())),  # contract in_features
            preferred_element_type=jnp.float32,
        )
        acc = c if acc is None else jnp.maximum(acc, c)
    o_ref[...] = acc.astype(o_ref.dtype)


def arc_margin_subcenter(features, weight, out_features, k, *,
                         eps=1e-12, max_tile_n=2048,
                         vmem_budget_bytes=24 * 1024 * 1024):
    """features: (B, in_features), weight: (out_features*k, in_features)."""
    B, in_features = features.shape
    assert weight.shape == (out_features * k, in_features)

    # Reorder weight rows so sub-center j is a contiguous slab:
    #   w3[j, c, :] == weight[c*k + j, :]   (k is fastest in the original rows)
    w3 = weight.reshape(out_features, k, in_features).swapaxes(0, 1)

    B_pad = _round_up(max(B, 8), 8)

    # Auto-size the class tile: largest lane-aligned tile whose double-buffered
    # weight block + double-buffered output block + resident features fit the
    # VMEM budget (bigger tiles -> fewer grid steps, closer to HBM roofline).
    w_itemsize = jnp.dtype(weight.dtype).itemsize
    f_bytes = B_pad * in_features * 4
    per_tn = 2 * k * in_features * w_itemsize + 2 * B_pad * 4
    tn = (max(vmem_budget_bytes - f_bytes, per_tn * 128) // per_tn) // 128 * 128
    out_pad = _round_up(out_features, 128)
    tn = int(max(128, min(tn, max_tile_n, out_pad)))
    out_pad = _round_up(out_pad, tn)
    if out_pad != out_features:
        w3 = jnp.pad(w3, ((0, 0), (0, out_pad - out_features), (0, 0)))

    f = features
    if B_pad != B:
        f = jnp.pad(f, ((0, B_pad - B), (0, 0)))

    grid = (out_pad // tn,)
    kernel = partial(_arc_margin_kernel, k=k, eps=eps)

    out = pl.pallas_call(
        kernel,
        out_shape=jax.ShapeDtypeStruct((B_pad, out_pad), jnp.float32),
        grid=grid,
        in_specs=[
            # Small feature block resident in VMEM across all class tiles.
            pl.BlockSpec((B_pad, in_features), lambda n: (0, 0)),
            # Streamed, auto double-buffered weight tiles.
            pl.BlockSpec((k, tn, in_features), lambda n: (0, n, 0)),
        ],
        out_specs=pl.BlockSpec((B_pad, tn), lambda n: (0, n)),
        compiler_params=pltpu.CompilerParams(
            dimension_semantics=("parallel",),
            vmem_limit_bytes=32 * 1024 * 1024,
        ),
    )(f, w3)

    return out[:B, :out_features]


if __name__ == "__main__":
    # Small shapes consistent with the module.
    B = 2
    in_features = 32
    out_features = 16
    k = 3

    key = jax.random.PRNGKey(0)
    kf, kw = jax.random.split(key)

    # Deterministic parameter init matching reset_parameters():
    # uniform(-stdv, stdv) with stdv = 1/sqrt(in_features).
    stdv = 1.0 / math.sqrt(in_features)
    weight = jax.random.uniform(
        kw, (out_features * k, in_features), dtype=jnp.float32,
        minval=-stdv, maxval=stdv,
    )
    features = jax.random.normal(kf, (B, in_features), dtype=jnp.float32)

    out = arc_margin_subcenter(features, weight, out_features, k)
    out = jax.block_until_ready(out)

    # Cross-check against a pure-JAX reference of the PyTorch forward.
    def ref(feats, w):
        fn = feats / jnp.maximum(
            jnp.linalg.norm(feats, axis=-1, keepdims=True), 1e-12)
        wn = w / jnp.maximum(
            jnp.linalg.norm(w, axis=-1, keepdims=True), 1e-12)
        cos_all = fn @ wn.T
        return jnp.max(cos_all.reshape(-1, out_features, k), axis=2)

    expected = ref(features, weight)
    assert out.shape == (B, out_features)
    assert jnp.allclose(out, expected, atol=1e-5, rtol=1e-5), (
        float(jnp.max(jnp.abs(out - expected))))

    print("KERNEL_OK")
</pallas_src>

<mosaic_0001>
module attributes {stable_mosaic.version = 11 : i64} {
  func.func @_arc_margin_kernel(%arg0: i32, %arg1: memref<8x32xf32, #tpu.memory_space<vmem>>, %arg2: memref<3x128x32xf32, #tpu.memory_space<vmem>>, %arg3: memref<8x128xf32, #tpu.memory_space<vmem>>) attributes {dimension_semantics = [#tpu.dimension_semantics<parallel>], iteration_bounds = array<i64: 1>, scalar_prefetch = 0 : i64, scratch_operands = 0 : i64, tpu.core_type = #tpu.core_type<tc>, window_params = [{pipeline_mode = #tpu.pipeline_mode<synchronous>, transform_indices = @transform_0, window_bounds = array<i64: 8, 32>}, {transform_indices = @transform_1, window_bounds = array<i64: 3, 128, 32>}, {transform_indices = @transform_2, window_bounds = array<i64: 8, 128>}]} {
    %c0 = arith.constant 0 : index
    %c0_0 = arith.constant 0 : index
    %0 = vector.load %arg1[%c0, %c0_0] : memref<8x32xf32, #tpu.memory_space<vmem>>, vector<8x32xf32>
    %1 = arith.mulf %0, %0 : vector<8x32xf32>
    %cst = arith.constant dense<0.000000e+00> : vector<8xf32>
    %2 = vector.multi_reduction <add>, %1, %cst [1] : vector<8x32xf32> to vector<8xf32>
    %3 = vector.shape_cast %2 : vector<8xf32> to vector<8x1xf32>
    %cst_1 = arith.constant 1.000000e-24 : f32
    %4 = vector.broadcast %cst_1 : f32 to vector<8x1xf32>
    %5 = arith.maximumf %3, %4 : vector<8x1xf32>
    %6 = math.rsqrt %5 : vector<8x1xf32>
    %7 = vector.broadcast %6 : vector<8x1xf32> to vector<8x32xf32>
    %8 = arith.mulf %0, %7 : vector<8x32xf32>
    %c0_2 = arith.constant 0 : index
    %c0_3 = arith.constant 0 : index
    %c0_4 = arith.constant 0 : index
    %9 = vector.load %arg2[%c0_2, %c0_3, %c0_4] : memref<3x128x32xf32, #tpu.memory_space<vmem>>, vector<1x128x32xf32>
    %10 = vector.shape_cast %9 : vector<1x128x32xf32> to vector<128x32xf32>
    %11 = arith.mulf %10, %10 : vector<128x32xf32>
    %cst_5 = arith.constant dense<0.000000e+00> : vector<128xf32>
    %12 = vector.multi_reduction <add>, %11, %cst_5 [1] : vector<128x32xf32> to vector<128xf32>
    %13 = vector.shape_cast %12 : vector<128xf32> to vector<128x1xf32>
    %cst_6 = arith.constant 1.000000e-24 : f32
    %14 = vector.broadcast %cst_6 : f32 to vector<128x1xf32>
    %15 = arith.maximumf %13, %14 : vector<128x1xf32>
    %16 = math.rsqrt %15 : vector<128x1xf32>
    %17 = vector.broadcast %16 : vector<128x1xf32> to vector<128x32xf32>
    %18 = arith.mulf %10, %17 : vector<128x32xf32>
    %cst_7 = arith.constant dense<0.000000e+00> : vector<8x128xf32>
    %19 = tpu.matmul %8, %18, %cst_7 {dimension_numbers = #tpu.dot_dimension_numbers<[1], [1], [0], [0], [0, 0, 1, 0], [], []>} : vector<8x32xf32>, vector<128x32xf32>, vector<8x128xf32> -> vector<8x128xf32>
    %c1 = arith.constant 1 : index
    %c0_8 = arith.constant 0 : index
    %c0_9 = arith.constant 0 : index
    %20 = vector.load %arg2[%c1, %c0_8, %c0_9] : memref<3x128x32xf32, #tpu.memory_space<vmem>>, vector<1x128x32xf32>
    %21 = vector.shape_cast %20 : vector<1x128x32xf32> to vector<128x32xf32>
    %22 = arith.mulf %21, %21 : vector<128x32xf32>
    %cst_10 = arith.constant dense<0.000000e+00> : vector<128xf32>
    %23 = vector.multi_reduction <add>, %22, %cst_10 [1] : vector<128x32xf32> to vector<128xf32>
    %24 = vector.shape_cast %23 : vector<128xf32> to vector<128x1xf32>
    %cst_11 = arith.constant 1.000000e-24 : f32
    %25 = vector.broadcast %cst_11 : f32 to vector<128x1xf32>
    %26 = arith.maximumf %24, %25 : vector<128x1xf32>
    %27 = math.rsqrt %26 : vector<128x1xf32>
    %28 = vector.broadcast %27 : vector<128x1xf32> to vector<128x32xf32>
    %29 = arith.mulf %21, %28 : vector<128x32xf32>
    %cst_12 = arith.constant dense<0.000000e+00> : vector<8x128xf32>
    %30 = tpu.matmul %8, %29, %cst_12 {dimension_numbers = #tpu.dot_dimension_numbers<[1], [1], [0], [0], [0, 0, 1, 0], [], []>} : vector<8x32xf32>, vector<128x32xf32>, vector<8x128xf32> -> vector<8x128xf32>
    %31 = arith.maximumf %19, %30 : vector<8x128xf32>
    %c2 = arith.constant 2 : index
    %c0_13 = arith.constant 0 : index
    %c0_14 = arith.constant 0 : index
    %32 = vector.load %arg2[%c2, %c0_13, %c0_14] : memref<3x128x32xf32, #tpu.memory_space<vmem>>, vector<1x128x32xf32>
    %33 = vector.shape_cast %32 : vector<1x128x32xf32> to vector<128x32xf32>
    %34 = arith.mulf %33, %33 : vector<128x32xf32>
    %cst_15 = arith.constant dense<0.000000e+00> : vector<128xf32>
    %35 = vector.multi_reduction <add>, %34, %cst_15 [1] : vector<128x32xf32> to vector<128xf32>
    %36 = vector.shape_cast %35 : vector<128xf32> to vector<128x1xf32>
    %cst_16 = arith.constant 1.000000e-24 : f32
    %37 = vector.broadcast %cst_16 : f32 to vector<128x1xf32>
    %38 = arith.maximumf %36, %37 : vector<128x1xf32>
    %39 = math.rsqrt %38 : vector<128x1xf32>
    %40 = vector.broadcast %39 : vector<128x1xf32> to vector<128x32xf32>
    %41 = arith.mulf %33, %40 : vector<128x32xf32>
    %cst_17 = arith.constant dense<0.000000e+00> : vector<8x128xf32>
    %42 = tpu.matmul %8, %41, %cst_17 {dimension_numbers = #tpu.dot_dimension_numbers<[1], [1], [0], [0], [0, 0, 1, 0], [], []>} : vector<8x32xf32>, vector<128x32xf32>, vector<8x128xf32> -> vector<8x128xf32>
    %43 = arith.maximumf %31, %42 : vector<8x128xf32>
    %c0_18 = arith.constant 0 : index
    %c0_19 = arith.constant 0 : index
    %44 = vector.load %arg3[%c0_18, %c0_19] : memref<8x128xf32, #tpu.memory_space<vmem>>, vector<8x128xf32>
    tpu.vector_store %arg3[%c0_18, %c0_19], %43 {strides = array<i32>} : memref<8x128xf32, #tpu.memory_space<vmem>>, vector<8x128xf32>,
    return
  }
  func.func @transform_0(%arg0: i32) -> (i32, i32) {
    %c0_i32 = arith.constant 0 : i32
    %c0_i32_0 = arith.constant 0 : i32
    %c0_i32_1 = arith.constant 0 : i32
    return %c0_i32, %c0_i32_0 : i32, i32
  }
  func.func @transform_1(%arg0: i32) -> (i32, i32, i32) {
    %c0_i32 = arith.constant 0 : i32
    %c0_i32_0 = arith.constant 0 : i32
    %c0_i32_1 = arith.constant 0 : i32
    return %c0_i32, %arg0, %c0_i32_0 : i32, i32, i32
  }
  func.func @transform_2(%arg0: i32) -> (i32, i32) {
    %c0_i32 = arith.constant 0 : i32
    %c0_i32_0 = arith.constant 0 : i32
    return %c0_i32, %arg0 : i32, i32
  }
}

</mosaic_0001>

<llo_original>
// kernel: tpu_custom_call.1
$region0: #{tpu_custom_call.1}
  #allocation0 [shape = 'u32[]', space=smem, size = 0x4, offset = 0x4, fixed_abs, tag = 'smem constant byte address 0x4 - core index']
  #allocation1 [shape = 'u32[144,128]{1,0:T(1,128)}', space=vmem, size = 0x12000, scoped, tag = 'internal scratch']
  %s0 = inlined_call_operand.vmem [shape: f32[8,32], index: 0, kind: input, shape index: {}]
  %s1 = inlined_call_operand.vmem [shape: f32[3,128,32], index: 1, kind: input, shape index: {}]
  %s2 = inlined_call_operand.hbm [shape: f32[8,128], index: 2, kind: output, shape index: {}]
  %s3 = sld [smem:[#allocation0]]
  $region18: #{tpu_custom_call.1} parent=0
    _
  %s5 = ssub.s32 1, %s3
  %s6 = scalar_select 0, %s5, %s3
  $region1: #{tpu_custom_call.1} parent=0
    #allocation2 [shape = 'u8[4096]{0}', space=vmem, size = 0x1000, scoped, tag = 'output window, operand 0, single buffered']
    #allocation3 [shape = 's32[1]{0}', space=sflag, size = 0x4, scoped, tag = 'scoped memory for tpu_custom_call.1']
    %7 = vsyncpa [#allocation3], 0
    // Predicated region
    $region2: #{tpu_custom_call.1} parent=1 // pred_check
      _
    $region3: #{tpu_custom_call.1} parent=1 // pred_check_branch
      %9 = sbr.rel (0) target = $region5
    $region4: #{tpu_custom_call.1} parent=1 // pred_region
      _
    $region5: #{tpu_custom_call.1} parent=1 // pred_fallthru
      _
    // Predicated region
    $region6: #{tpu_custom_call.1} parent=1 // pred_check
      _
    $region7: #{tpu_custom_call.1} parent=1 // pred_check_branch
      %11 = sbr.rel (0) target = $region9
    $region8: #{tpu_custom_call.1} parent=1 // pred_region
      _
    $region9: #{tpu_custom_call.1} parent=1 // pred_fallthru
      _
    %v12 = vld [vmem:[%s0] sm:$0xff]
    %v13 = vmul.f32 %v12, %v12
    %vm14 = vcmask 261120
    %v15 = vsel %vm14, %v13, 0.0
    %16 = vadd.xlane.f32.xlu0 %v15
    %v17 = vpop.xlane.xlu0 %16
    %v18 = vmax.f32 %v17, 1e-24
    %v19 = vrsqrt.pop %v18
    %v20 = vmul.f32 %v12, %v19
    %v21 = vld [vmem:[%s1] sm:$0xff]
    %v22 = vld [vmem:[%s1 + $0x8] sm:$0xff]
    %v23 = vld [vmem:[%s1 + $0x10] sm:$0xff]
    %v24 = vld [vmem:[%s1 + $0x18] sm:$0xff]
    %v25 = vld [vmem:[%s1 + $0x20] sm:$0xff]
    %v26 = vld [vmem:[%s1 + $0x28] sm:$0xff]
    %v27 = vld [vmem:[%s1 + $0x30] sm:$0xff]
    %v28 = vld [vmem:[%s1 + $0x38] sm:$0xff]
    %v29 = vld [vmem:[%s1 + $0x40] sm:$0xff]
    %v30 = vld [vmem:[%s1 + $0x48] sm:$0xff]
    %v31 = vld [vmem:[%s1 + $0x50] sm:$0xff]
    %v32 = vld [vmem:[%s1 + $0x58] sm:$0xff]
    %v33 = vld [vmem:[%s1 + $0x60] sm:$0xff]
    %v34 = vld [vmem:[%s1 + $0x68] sm:$0xff]
    %v35 = vld [vmem:[%s1 + $0x70] sm:$0xff]
    %v36 = vld [vmem:[%s1 + $0x78] sm:$0xff]
    %v37 = vmul.f32 %v21, %v21
    %v38 = vmul.f32 %v22, %v22
    %v39 = vmul.f32 %v23, %v23
    %v40 = vmul.f32 %v24, %v24
    %v41 = vmul.f32 %v25, %v25
    %v42 = vmul.f32 %v26, %v26
    %v43 = vmul.f32 %v27, %v27
    %v44 = vmul.f32 %v28, %v28
    %v45 = vmul.f32 %v29, %v29
    %v46 = vmul.f32 %v30, %v30
    %v47 = vmul.f32 %v31, %v31
    %v48 = vmul.f32 %v32, %v32
    %v49 = vmul.f32 %v33, %v33
    %v50 = vmul.f32 %v34, %v34
    %v51 = vmul.f32 %v35, %v35
    %v52 = vmul.f32 %v36, %v36
    %v53 = vsel %vm14, %v37, 0.0
    %54 = vadd.xlane.f32.xlu0 %v53
    %v55 = vpop.xlane.xlu0 %54
    %v56 = vsel %vm14, %v38, 0.0
    %57 = vadd.xlane.f32.xlu0 %v56
    %v58 = vpop.xlane.xlu0 %57
    %v59 = vsel %vm14, %v39, 0.0
    %60 = vadd.xlane.f32.xlu0 %v59
    %v61 = vpop.xlane.xlu0 %60
    %v62 = vsel %vm14, %v40, 0.0
    %63 = vadd.xlane.f32.xlu0 %v62
    %v64 = vpop.xlane.xlu0 %63
    %v65 = vsel %vm14, %v41, 0.0
    %66 = vadd.xlane.f32.xlu0 %v65
    %v67 = vpop.xlane.xlu0 %66
    %v68 = vsel %vm14, %v42, 0.0
    %69 = vadd.xlane.f32.xlu0 %v68
    %v70 = vpop.xlane.xlu0 %69
    %v71 = vsel %vm14, %v43, 0.0
    %72 = vadd.xlane.f32.xlu0 %v71
    %v73 = vpop.xlane.xlu0 %72
    %v74 = vsel %vm14, %v44, 0.0
    %75 = vadd.xlane.f32.xlu0 %v74
    %v76 = vpop.xlane.xlu0 %75
    %v77 = vsel %vm14, %v45, 0.0
    %78 = vadd.xlane.f32.xlu0 %v77
    %v79 = vpop.xlane.xlu0 %78
    %v80 = vsel %vm14, %v46, 0.0
    %81 = vadd.xlane.f32.xlu0 %v80
    %v82 = vpop.xlane.xlu0 %81
    %v83 = vsel %vm14, %v47, 0.0
    %84 = vadd.xlane.f32.xlu0 %v83
    %v85 = vpop.xlane.xlu0 %84
    %v86 = vsel %vm14, %v48, 0.0
    %87 = vadd.xlane.f32.xlu0 %v86
    %v88 = vpop.xlane.xlu0 %87
    %v89 = vsel %vm14, %v49, 0.0
    %90 = vadd.xlane.f32.xlu0 %v89
    %v91 = vpop.xlane.xlu0 %90
    %v92 = vsel %vm14, %v50, 0.0
    %93 = vadd.xlane.f32.xlu0 %v92
    %v94 = vpop.xlane.xlu0 %93
    %v95 = vsel %vm14, %v51, 0.0
    %96 = vadd.xlane.f32.xlu0 %v95
    %v97 = vpop.xlane.xlu0 %96
    %v98 = vsel %vm14, %v52, 0.0
    %99 = vadd.xlane.f32.xlu0 %v98
    %v100 = vpop.xlane.xlu0 %99
    %v101 = vmax.f32 %v55, 1e-24
    %v102 = vmax.f32 %v58, 1e-24
    %v103 = vmax.f32 %v61, 1e-24
    %v104 = vmax.f32 %v64, 1e-24
    %v105 = vmax.f32 %v67, 1e-24
    %v106 = vmax.f32 %v70, 1e-24
    %v107 = vmax.f32 %v73, 1e-24
    %v108 = vmax.f32 %v76, 1e-24
    %v109 = vmax.f32 %v79, 1e-24
    %v110 = vmax.f32 %v82, 1e-24
    %v111 = vmax.f32 %v85, 1e-24
    %v112 = vmax.f32 %v88, 1e-24
    %v113 = vmax.f32 %v91, 1e-24
    %v114 = vmax.f32 %v94, 1e-24
    %v115 = vmax.f32 %v97, 1e-24
    %v116 = vmax.f32 %v100, 1e-24
    %v117 = vrsqrt.pop %v101
    %v118 = vrsqrt.pop %v102
    %v119 = vrsqrt.pop %v103
    %v120 = vrsqrt.pop %v104
    %v121 = vrsqrt.pop %v105
    %v122 = vrsqrt.pop %v106
    %v123 = vrsqrt.pop %v107
    %v124 = vrsqrt.pop %v108
    %v125 = vrsqrt.pop %v109
    %v126 = vrsqrt.pop %v110
    %v127 = vrsqrt.pop %v111
    %v128 = vrsqrt.pop %v112
    %v129 = vrsqrt.pop %v113
    %v130 = vrsqrt.pop %v114
    %v131 = vrsqrt.pop %v115
    %v132 = vrsqrt.pop %v116
    %v133 = vmul.f32 %v21, %v117
    %v134 = vmul.f32 %v22, %v118
    %v135 = vmul.f32 %v23, %v119
    %v136 = vmul.f32 %v24, %v120
    %v137 = vmul.f32 %v25, %v121
    %v138 = vmul.f32 %v26, %v122
    %v139 = vmul.f32 %v27, %v123
    %v140 = vmul.f32 %v28, %v124
    %v141 = vmul.f32 %v29, %v125
    %v142 = vmul.f32 %v30, %v126
    %v143 = vmul.f32 %v31, %v127
    %v144 = vmul.f32 %v32, %v128
    %v145 = vmul.f32 %v33, %v129
    %v146 = vmul.f32 %v34, %v130
    %v147 = vmul.f32 %v35, %v131
    %v148 = vmul.f32 %v36, %v132
    %v150 = vsel %vm14, %v20, 0
    %v153 = vsel %vm14, %v133, 0
    %v156 = vsel %vm14, %v134, 0
    %v159 = vsel %vm14, %v135, 0
    %v162 = vsel %vm14, %v136, 0
    %v165 = vsel %vm14, %v137, 0
    %v168 = vsel %vm14, %v138, 0
    %v171 = vsel %vm14, %v139, 0
    %v174 = vsel %vm14, %v140, 0
    %v177 = vsel %vm14, %v141, 0
    %v180 = vsel %vm14, %v142, 0
    %v183 = vsel %vm14, %v143, 0
    %v186 = vsel %vm14, %v144, 0
    %v189 = vsel %vm14, %v145, 0
    %v192 = vsel %vm14, %v146, 0
    %v195 = vsel %vm14, %v147, 0
    %v198 = vsel %vm14, %v148, 0
    %200 = vmatprep.subr.mxu0 0.0
    %201 = vmatpush1.xpose.msra.mxu0 %v198
    %202 = vmatprep.subr.mxu0 0.0
    %203 = vmatpush1.xpose.msra.mxu0 %v195
    %204 = vmatprep.subr.mxu0 0.0
    %205 = vmatpush1.xpose.msra.mxu0 %v192
    %206 = vmatprep.subr.mxu0 0.0
    %207 = vmatpush1.xpose.msra.mxu0 %v189
    %208 = vmatprep.subr.mxu0 0.0
    %209 = vmatpush1.xpose.msra.mxu0 %v186
    %210 = vmatprep.subr.mxu0 0.0
    %211 = vmatpush1.xpose.msra.mxu0 %v183
    %212 = vmatprep.subr.mxu0 0.0
    %213 = vmatpush1.xpose.msra.mxu0 %v180
    %214 = vmatprep.subr.mxu0 0.0
    %215 = vmatpush1.xpose.msra.mxu0 %v177
    %216 = vmatprep.subr.mxu0 0.0
    %217 = vmatpush1.xpose.msra.mxu0 %v174
    %218 = vmatprep.subr.mxu0 0.0
    %219 = vmatpush1.xpose.msra.mxu0 %v171
    %220 = vmatprep.subr.mxu0 0.0
    %221 = vmatpush1.xpose.msra.mxu0 %v168
    %222 = vmatprep.subr.mxu0 0.0
    %223 = vmatpush1.xpose.msra.mxu0 %v165
    %224 = vmatprep.subr.mxu0 0.0
    %225 = vmatpush1.xpose.msra.mxu0 %v162
    %226 = vmatprep.subr.mxu0 0.0
    %227 = vmatpush1.xpose.msra.mxu0 %v159
    %228 = vmatprep.subr.mxu0 0.0
    %229 = vmatpush1.xpose.msra.mxu0 %v156
    %230 = vmatprep.subr.mxu0 0.0
    %231 = vmatpush1.xpose.msra.mxu0 %v153
    %232 = vmatprep.subr.mxu0 0.0
    %233 = vmatpush2.xpose.msra.mxu0 0.0
    %234 = vmatprep.subr.mxu0 0.0
    %235 = vmatpush2.xpose.msra.mxu0 0.0
    %236 = vmatprep.subr.mxu0 0.0
    %237 = vmatpush2.xpose.msra.mxu0 0.0
    %238 = vmatprep.subr.mxu0 0.0
    %239 = vmatpush2.xpose.msra.mxu0 0.0
    %240 = vmatprep.subr.mxu0 0.0
    %241 = vmatpush2.xpose.msra.mxu0 0.0
    %242 = vmatprep.subr.mxu0 0.0
    %243 = vmatpush2.xpose.msra.mxu0 0.0
    %244 = vmatprep.subr.mxu0 0.0
    %245 = vmatpush2.xpose.msra.mxu0 0.0
    %246 = vmatprep.subr.mxu0 0.0
    %247 = vmatpush2.xpose.msra.mxu0 0.0
    %248 = vmatprep.subr.mxu0 0.0
    %249 = vmatpush2.xpose.msra.mxu0 0.0
    %250 = vmatprep.subr.mxu0 0.0
    %251 = vmatpush2.xpose.msra.mxu0 0.0
    %252 = vmatprep.subr.mxu0 0.0
    %253 = vmatpush2.xpose.msra.mxu0 0.0
    %254 = vmatprep.subr.mxu0 0.0
    %255 = vmatpush2.xpose.msra.mxu0 0.0
    %256 = vmatprep.subr.mxu0 0.0
    %257 = vmatpush2.xpose.msra.mxu0 0.0
    %258 = vmatprep.subr.mxu0 0.0
    %259 = vmatpush2.xpose.msra.mxu0 0.0
    %260 = vmatprep.subr.mxu0 0.0
    %261 = vmatpush2.xpose.msra.mxu0 0.0
    %262 = vmatprep.subr.mxu0 0.0
    %263 = vmatpush2.xpose.msra.mxu0 0.0
    %264 = vmatprep.mubr.f32.mxu0 0.0
    %265 = vmatmul.mubr.f32.gmra.mxu0 %v150
    %v266 = vpop.f32.mrf.mxu0
    %v267 = vadd.f32 0.0, %v266
    %v268 = vpop.f32.mrf.mxu0
    %269 = vdwg.mxu0
    %s270 = scalar_lea.vmem %s1, 128
    %v271 = vld [vmem:[%s270] sm:$0xff]
    %v272 = vld [vmem:[%s270 + $0x8] sm:$0xff]
    %v273 = vld [vmem:[%s270 + $0x10] sm:$0xff]
    %v274 = vld [vmem:[%s270 + $0x18] sm:$0xff]
    %v275 = vld [vmem:[%s270 + $0x20] sm:$0xff]
    %v276 = vld [vmem:[%s270 + $0x28] sm:$0xff]
    %v277 = vld [vmem:[%s270 + $0x30] sm:$0xff]
    %v278 = vld [vmem:[%s270 + $0x38] sm:$0xff]
    %v279 = vld [vmem:[%s270 + $0x40] sm:$0xff]
    %v280 = vld [vmem:[%s270 + $0x48] sm:$0xff]
    %v281 = vld [vmem:[%s270 + $0x50] sm:$0xff]
    %v282 = vld [vmem:[%s270 + $0x58] sm:$0xff]
    %v283 = vld [vmem:[%s270 + $0x60] sm:$0xff]
    %v284 = vld [vmem:[%s270 + $0x68] sm:$0xff]
    %v285 = vld [vmem:[%s270 + $0x70] sm:$0xff]
    %v286 = vld [vmem:[%s270 + $0x78] sm:$0xff]
    %v287 = vmul.f32 %v271, %v271
    %v288 = vmul.f32 %v272, %v272
    %v289 = vmul.f32 %v273, %v273
    %v290 = vmul.f32 %v274, %v274
    %v291 = vmul.f32 %v275, %v275
    %v292 = vmul.f32 %v276, %v276
    %v293 = vmul.f32 %v277, %v277
    %v294 = vmul.f32 %v278, %v278
    %v295 = vmul.f32 %v279, %v279
    %v296 = vmul.f32 %v280, %v280
    %v297 = vmul.f32 %v281, %v281
    %v298 = vmul.f32 %v282, %v282
    %v299 = vmul.f32 %v283, %v283
    %v300 = vmul.f32 %v284, %v284
    %v301 = vmul.f32 %v285, %v285
    %v302 = vmul.f32 %v286, %v286
    %v303 = vsel %vm14, %v287, 0.0
    %304 = vadd.xlane.f32.xlu0 %v303
    %v305 = vpop.xlane.xlu0 %304
    %v306 = vsel %vm14, %v288, 0.0
    %307 = vadd.xlane.f32.xlu0 %v306
    %v308 = vpop.xlane.xlu0 %307
    %v309 = vsel %vm14, %v289, 0.0
    %310 = vadd.xlane.f32.xlu0 %v309
    %v311 = vpop.xlane.xlu0 %310
    %v312 = vsel %vm14, %v290, 0.0
    %313 = vadd.xlane.f32.xlu0 %v312
    %v314 = vpop.xlane.xlu0 %313
    %v315 = vsel %vm14, %v291, 0.0
    %316 = vadd.xlane.f32.xlu0 %v315
    %v317 = vpop.xlane.xlu0 %316
    %v318 = vsel %vm14, %v292, 0.0
    %319 = vadd.xlane.f32.xlu0 %v318
    %v320 = vpop.xlane.xlu0 %319
    %v321 = vsel %vm14, %v293, 0.0
    %322 = vadd.xlane.f32.xlu0 %v321
    %v323 = vpop.xlane.xlu0 %322
    %v324 = vsel %vm14, %v294, 0.0
    %325 = vadd.xlane.f32.xlu0 %v324
    %v326 = vpop.xlane.xlu0 %325
    %v327 = vsel %vm14, %v295, 0.0
    %328 = vadd.xlane.f32.xlu0 %v327
    %v329 = vpop.xlane.xlu0 %328
    %v330 = vsel %vm14, %v296, 0.0
    %331 = vadd.xlane.f32.xlu0 %v330
    %v332 = vpop.xlane.xlu0 %331
    %v333 = vsel %vm14, %v297, 0.0
    %334 = vadd.xlane.f32.xlu0 %v333
    %v335 = vpop.xlane.xlu0 %334
    %v336 = vsel %vm14, %v298, 0.0
    %337 = vadd.xlane.f32.xlu0 %v336
    %v338 = vpop.xlane.xlu0 %337
    %v339 = vsel %vm14, %v299, 0.0
    %340 = vadd.xlane.f32.xlu0 %v339
    %v341 = vpop.xlane.xlu0 %340
    %v342 = vsel %vm14, %v300, 0.0
    %343 = vadd.xlane.f32.xlu0 %v342
    %v344 = vpop.xlane.xlu0 %343
    %v345 = vsel %vm14, %v301, 0.0
    %346 = vadd.xlane.f32.xlu0 %v345
    %v347 = vpop.xlane.xlu0 %346
    %v348 = vsel %vm14, %v302, 0.0
    %349 = vadd.xlane.f32.xlu0 %v348
    %v350 = vpop.xlane.xlu0 %349
    %v351 = vmax.f32 %v305, 1e-24
    %v352 = vmax.f32 %v308, 1e-24
    %v353 = vmax.f32 %v311, 1e-24
    %v354 = vmax.f32 %v314, 1e-24
    %v355 = vmax.f32 %v317, 1e-24
    %v356 = vmax.f32 %v320, 1e-24
    %v357 = vmax.f32 %v323, 1e-24
    %v358 = vmax.f32 %v326, 1e-24
    %v359 = vmax.f32 %v329, 1e-24
    %v360 = vmax.f32 %v332, 1e-24
    %v361 = vmax.f32 %v335, 1e-24
    %v362 = vmax.f32 %v338, 1e-24
    %v363 = vmax.f32 %v341, 1e-24
    %v364 = vmax.f32 %v344, 1e-24
    %v365 = vmax.f32 %v347, 1e-24
    %v366 = vmax.f32 %v350, 1e-24
    %v367 = vrsqrt.pop %v351
    %v368 = vrsqrt.pop %v352
    %v369 = vrsqrt.pop %v353
    %v370 = vrsqrt.pop %v354
    %v371 = vrsqrt.pop %v355
    %v372 = vrsqrt.pop %v356
    %v373 = vrsqrt.pop %v357
    %v374 = vrsqrt.pop %v358
    %v375 = vrsqrt.pop %v359
    %v376 = vrsqrt.pop %v360
    %v377 = vrsqrt.pop %v361
    %v378 = vrsqrt.pop %v362
    %v379 = vrsqrt.pop %v363
    %v380 = vrsqrt.pop %v364
    %v381 = vrsqrt.pop %v365
    %v382 = vrsqrt.pop %v366
    %v383 = vmul.f32 %v271, %v367
    %v384 = vmul.f32 %v272, %v368
    %v385 = vmul.f32 %v273, %v369
    %v386 = vmul.f32 %v274, %v370
    %v387 = vmul.f32 %v275, %v371
    %v388 = vmul.f32 %v276, %v372
    %v389 = vmul.f32 %v277, %v373
    %v390 = vmul.f32 %v278, %v374
    %v391 = vmul.f32 %v279, %v375
    %v392 = vmul.f32 %v280, %v376
    %v393 = vmul.f32 %v281, %v377
    %v394 = vmul.f32 %v282, %v378
    %v395 = vmul.f32 %v283, %v379
    %v396 = vmul.f32 %v284, %v380
    %v397 = vmul.f32 %v285, %v381
    %v398 = vmul.f32 %v286, %v382
    %v400 = vsel %vm14, %v383, 0
    %v403 = vsel %vm14, %v384, 0
    %v406 = vsel %vm14, %v385, 0
    %v409 = vsel %vm14, %v386, 0
    %v412 = vsel %vm14, %v387, 0
    %v415 = vsel %vm14, %v388, 0
    %v418 = vsel %vm14, %v389, 0
    %v421 = vsel %vm14, %v390, 0
    %v424 = vsel %vm14, %v391, 0
    %v427 = vsel %vm14, %v392, 0
    %v430 = vsel %vm14, %v393, 0
    %v433 = vsel %vm14, %v394, 0
    %v436 = vsel %vm14, %v395, 0
    %v439 = vsel %vm14, %v396, 0
    %v442 = vsel %vm14, %v397, 0
    %v445 = vsel %vm14, %v398, 0
    %447 = vmatprep.subr.mxu0 0.0
    %448 = vmatpush1.xpose.msra.mxu0 %v445
    %449 = vmatprep.subr.mxu0 0.0
    %450 = vmatpush1.xpose.msra.mxu0 %v442
    %451 = vmatprep.subr.mxu0 0.0
    %452 = vmatpush1.xpose.msra.mxu0 %v439
    %453 = vmatprep.subr.mxu0 0.0
    %454 = vmatpush1.xpose.msra.mxu0 %v436
    %455 = vmatprep.subr.mxu0 0.0
    %456 = vmatpush1.xpose.msra.mxu0 %v433
    %457 = vmatprep.subr.mxu0 0.0
    %458 = vmatpush1.xpose.msra.mxu0 %v430
    %459 = vmatprep.subr.mxu0 0.0
    %460 = vmatpush1.xpose.msra.mxu0 %v427
    %461 = vmatprep.subr.mxu0 0.0
    %462 = vmatpush1.xpose.msra.mxu0 %v424
    %463 = vmatprep.subr.mxu0 0.0
    %464 = vmatpush1.xpose.msra.mxu0 %v421
    %465 = vmatprep.subr.mxu0 0.0
    %466 = vmatpush1.xpose.msra.mxu0 %v418
    %467 = vmatprep.subr.mxu0 0.0
    %468 = vmatpush1.xpose.msra.mxu0 %v415
    %469 = vmatprep.subr.mxu0 0.0
    %470 = vmatpush1.xpose.msra.mxu0 %v412
    %471 = vmatprep.subr.mxu0 0.0
    %472 = vmatpush1.xpose.msra.mxu0 %v409
    %473 = vmatprep.subr.mxu0 0.0
    %474 = vmatpush1.xpose.msra.mxu0 %v406
    %475 = vmatprep.subr.mxu0 0.0
    %476 = vmatpush1.xpose.msra.mxu0 %v403
    %477 = vmatprep.subr.mxu0 0.0
    %478 = vmatpush1.xpose.msra.mxu0 %v400
    %479 = vmatprep.subr.mxu0 0.0
    %480 = vmatpush2.xpose.msra.mxu0 0.0
    %481 = vmatprep.subr.mxu0 0.0
    %482 = vmatpush2.xpose.msra.mxu0 0.0
    %483 = vmatprep.subr.mxu0 0.0
    %484 = vmatpush2.xpose.msra.mxu0 0.0
    %485 = vmatprep.subr.mxu0 0.0
    %486 = vmatpush2.xpose.msra.mxu0 0.0
    %487 = vmatprep.subr.mxu0 0.0
    %488 = vmatpush2.xpose.msra.mxu0 0.0
    %489 = vmatprep.subr.mxu0 0.0
    %490 = vmatpush2.xpose.msra.mxu0 0.0
    %491 = vmatprep.subr.mxu0 0.0
    %492 = vmatpush2.xpose.msra.mxu0 0.0
    %493 = vmatprep.subr.mxu0 0.0
    %494 = vmatpush2.xpose.msra.mxu0 0.0
    %495 = vmatprep.subr.mxu0 0.0
    %496 = vmatpush2.xpose.msra.mxu0 0.0
    %497 = vmatprep.subr.mxu0 0.0
    %498 = vmatpush2.xpose.msra.mxu0 0.0
    %499 = vmatprep.subr.mxu0 0.0
    %500 = vmatpush2.xpose.msra.mxu0 0.0
    %501 = vmatprep.subr.mxu0 0.0
    %502 = vmatpush2.xpose.msra.mxu0 0.0
    %503 = vmatprep.subr.mxu0 0.0
    %504 = vmatpush2.xpose.msra.mxu0 0.0
    %505 = vmatprep.subr.mxu0 0.0
    %506 = vmatpush2.xpose.msra.mxu0 0.0
    %507 = vmatprep.subr.mxu0 0.0
    %508 = vmatpush2.xpose.msra.mxu0 0.0
    %509 = vmatprep.subr.mxu0 0.0
    %510 = vmatpush2.xpose.msra.mxu0 0.0
    %511 = vmatprep.mubr.f32.mxu0 0.0
    %512 = vmatmul.mubr.f32.gmra.mxu0 %v150
    %v513 = vpop.f32.mrf.mxu0
    %v514 = vadd.f32 0.0, %v513
    %v515 = vpop.f32.mrf.mxu0
    %516 = vdwg.mxu0
    %v517 = vmax.f32 %v267, %v514
    %s518 = scalar_lea.vmem %s1, 256
    %v519 = vld [vmem:[%s518] sm:$0xff]
    %v520 = vld [vmem:[%s518 + $0x8] sm:$0xff]
    %v521 = vld [vmem:[%s518 + $0x10] sm:$0xff]
    %v522 = vld [vmem:[%s518 + $0x18] sm:$0xff]
    %v523 = vld [vmem:[%s518 + $0x20] sm:$0xff]
    %v524 = vld [vmem:[%s518 + $0x28] sm:$0xff]
    %v525 = vld [vmem:[%s518 + $0x30] sm:$0xff]
    %v526 = vld [vmem:[%s518 + $0x38] sm:$0xff]
    %v527 = vld [vmem:[%s518 + $0x40] sm:$0xff]
    %v528 = vld [vmem:[%s518 + $0x48] sm:$0xff]
    %v529 = vld [vmem:[%s518 + $0x50] sm:$0xff]
    %v530 = vld [vmem:[%s518 + $0x58] sm:$0xff]
    %v531 = vld [vmem:[%s518 + $0x60] sm:$0xff]
    %v532 = vld [vmem:[%s518 + $0x68] sm:$0xff]
    %v533 = vld [vmem:[%s518 + $0x70] sm:$0xff]
    %v534 = vld [vmem:[%s518 + $0x78] sm:$0xff]
    %v535 = vmul.f32 %v519, %v519
    %v536 = vmul.f32 %v520, %v520
    %v537 = vmul.f32 %v521, %v521
    %v538 = vmul.f32 %v522, %v522
    %v539 = vmul.f32 %v523, %v523
    %v540 = vmul.f32 %v524, %v524
    %v541 = vmul.f32 %v525, %v525
    %v542 = vmul.f32 %v526, %v526
    %v543 = vmul.f32 %v527, %v527
    %v544 = vmul.f32 %v528, %v528
    %v545 = vmul.f32 %v529, %v529
    %v546 = vmul.f32 %v530, %v530
    %v547 = vmul.f32 %v531, %v531
    %v548 = vmul.f32 %v532, %v532
    %v549 = vmul.f32 %v533, %v533
    %v550 = vmul.f32 %v534, %v534
    %v551 = vsel %vm14, %v535, 0.0
    %552 = vadd.xlane.f32.xlu0 %v551
    %v553 = vpop.xlane.xlu0 %552
    %v554 = vsel %vm14, %v536, 0.0
    %555 = vadd.xlane.f32.xlu0 %v554
    %v556 = vpop.xlane.xlu0 %555
    %v557 = vsel %vm14, %v537, 0.0
    %558 = vadd.xlane.f32.xlu0 %v557
    %v559 = vpop.xlane.xlu0 %558
    %v560 = vsel %vm14, %v538, 0.0
    %561 = vadd.xlane.f32.xlu0 %v560
    %v562 = vpop.xlane.xlu0 %561
    %v563 = vsel %vm14, %v539, 0.0
    %564 = vadd.xlane.f32.xlu0 %v563
    %v565 = vpop.xlane.xlu0 %564
    %v566 = vsel %vm14, %v540, 0.0
    %567 = vadd.xlane.f32.xlu0 %v566
    %v568 = vpop.xlane.xlu0 %567
    %v569 = vsel %vm14, %v541, 0.0
    %570 = vadd.xlane.f32.xlu0 %v569
    %v571 = vpop.xlane.xlu0 %570
    %v572 = vsel %vm14, %v542, 0.0
    %573 = vadd.xlane.f32.xlu0 %v572
    %v574 = vpop.xlane.xlu0 %573
    %v575 = vsel %vm14, %v543, 0.0
    %576 = vadd.xlane.f32.xlu0 %v575
    %v577 = vpop.xlane.xlu0 %576
    %v578 = vsel %vm14, %v544, 0.0
    %579 = vadd.xlane.f32.xlu0 %v578
    %v580 = vpop.xlane.xlu0 %579
    %v581 = vsel %vm14, %v545, 0.0
    %582 = vadd.xlane.f32.xlu0 %v581
    %v583 = vpop.xlane.xlu0 %582
    %v584 = vsel %vm14, %v546, 0.0
    %585 = vadd.xlane.f32.xlu0 %v584
    %v586 = vpop.xlane.xlu0 %585
    %v587 = vsel %vm14, %v547, 0.0
    %588 = vadd.xlane.f32.xlu0 %v587
    %v589 = vpop.xlane.xlu0 %588
    %v590 = vsel %vm14, %v548, 0.0
    %591 = vadd.xlane.f32.xlu0 %v590
    %v592 = vpop.xlane.xlu0 %591
    %v593 = vsel %vm14, %v549, 0.0
    %594 = vadd.xlane.f32.xlu0 %v593
    %v595 = vpop.xlane.xlu0 %594
    %v596 = vsel %vm14, %v550, 0.0
    %597 = vadd.xlane.f32.xlu0 %v596
    %v598 = vpop.xlane.xlu0 %597
    %v599 = vmax.f32 %v553, 1e-24
    %v600 = vmax.f32 %v556, 1e-24
    %v601 = vmax.f32 %v559, 1e-24
    %v602 = vmax.f32 %v562, 1e-24
    %v603 = vmax.f32 %v565, 1e-24
    %v604 = vmax.f32 %v568, 1e-24
    %v605 = vmax.f32 %v571, 1e-24
    %v606 = vmax.f32 %v574, 1e-24
    %v607 = vmax.f32 %v577, 1e-24
    %v608 = vmax.f32 %v580, 1e-24
    %v609 = vmax.f32 %v583, 1e-24
    %v610 = vmax.f32 %v586, 1e-24
    %v611 = vmax.f32 %v589, 1e-24
    %v612 = vmax.f32 %v592, 1e-24
    %v613 = vmax.f32 %v595, 1e-24
    %v614 = vmax.f32 %v598, 1e-24
    %v615 = vrsqrt.pop %v599
    %v616 = vrsqrt.pop %v600
    %v617 = vrsqrt.pop %v601
    %v618 = vrsqrt.pop %v602
    %v619 = vrsqrt.pop %v603
    %v620 = vrsqrt.pop %v604
    %v621 = vrsqrt.pop %v605
    %v622 = vrsqrt.pop %v606
    %v623 = vrsqrt.pop %v607
    %v624 = vrsqrt.pop %v608
    %v625 = vrsqrt.pop %v609
    %v626 = vrsqrt.pop %v610
    %v627 = vrsqrt.pop %v611
    %v628 = vrsqrt.pop %v612
    %v629 = vrsqrt.pop %v613
    %v630 = vrsqrt.pop %v614
    %v631 = vmul.f32 %v519, %v615
    %v632 = vmul.f32 %v520, %v616
    %v633 = vmul.f32 %v521, %v617
    %v634 = vmul.f32 %v522, %v618
    %v635 = vmul.f32 %v523, %v619
    %v636 = vmul.f32 %v524, %v620
    %v637 = vmul.f32 %v525, %v621
    %v638 = vmul.f32 %v526, %v622
    %v639 = vmul.f32 %v527, %v623
    %v640 = vmul.f32 %v528, %v624
    %v641 = vmul.f32 %v529, %v625
    %v642 = vmul.f32 %v530, %v626
    %v643 = vmul.f32 %v531, %v627
    %v644 = vmul.f32 %v532, %v628
    %v645 = vmul.f32 %v533, %v629
    %v646 = vmul.f32 %v534, %v630
    %v648 = vsel %vm14, %v631, 0
    %v651 = vsel %vm14, %v632, 0
    %v654 = vsel %vm14, %v633, 0
    %v657 = vsel %vm14, %v634, 0
    %v660 = vsel %vm14, %v635, 0
    %v663 = vsel %vm14, %v636, 0
    %v666 = vsel %vm14, %v637, 0
    %v669 = vsel %vm14, %v638, 0
    %v672 = vsel %vm14, %v639, 0
    %v675 = vsel %vm14, %v640, 0
    %v678 = vsel %vm14, %v641, 0
    %v681 = vsel %vm14, %v642, 0
    %v684 = vsel %vm14, %v643, 0
    %v687 = vsel %vm14, %v644, 0
    %v690 = vsel %vm14, %v645, 0
    %v693 = vsel %vm14, %v646, 0
    %695 = vmatprep.subr.mxu0 0.0
    %696 = vmatpush1.xpose.msra.mxu0 %v693
    %697 = vmatprep.subr.mxu0 0.0
    %698 = vmatpush1.xpose.msra.mxu0 %v690
    %699 = vmatprep.subr.mxu0 0.0
    %700 = vmatpush1.xpose.msra.mxu0 %v687
    %701 = vmatprep.subr.mxu0 0.0
    %702 = vmatpush1.xpose.msra.mxu0 %v684
    %703 = vmatprep.subr.mxu0 0.0
    %704 = vmatpush1.xpose.msra.mxu0 %v681
    %705 = vmatprep.subr.mxu0 0.0
    %706 = vmatpush1.xpose.msra.mxu0 %v678
    %707 = vmatprep.subr.mxu0 0.0
    %708 = vmatpush1.xpose.msra.mxu0 %v675
    %709 = vmatprep.subr.mxu0 0.0
    %710 = vmatpush1.xpose.msra.mxu0 %v672
    %711 = vmatprep.subr.mxu0 0.0
    %712 = vmatpush1.xpose.msra.mxu0 %v669
    %713 = vmatprep.subr.mxu0 0.0
    %714 = vmatpush1.xpose.msra.mxu0 %v666
    %715 = vmatprep.subr.mxu0 0.0
    %716 = vmatpush1.xpose.msra.mxu0 %v663
    %717 = vmatprep.subr.mxu0 0.0
    %718 = vmatpush1.xpose.msra.mxu0 %v660
    %719 = vmatprep.subr.mxu0 0.0
    %720 = vmatpush1.xpose.msra.mxu0 %v657
    %721 = vmatprep.subr.mxu0 0.0
    %722 = vmatpush1.xpose.msra.mxu0 %v654
    %723 = vmatprep.subr.mxu0 0.0
    %724 = vmatpush1.xpose.msra.mxu0 %v651
    %725 = vmatprep.subr.mxu0 0.0
    %726 = vmatpush1.xpose.msra.mxu0 %v648
    %727 = vmatprep.subr.mxu0 0.0
    %728 = vmatpush2.xpose.msra.mxu0 0.0
    %729 = vmatprep.subr.mxu0 0.0
    %730 = vmatpush2.xpose.msra.mxu0 0.0
    %731 = vmatprep.subr.mxu0 0.0
    %732 = vmatpush2.xpose.msra.mxu0 0.0
    %733 = vmatprep.subr.mxu0 0.0
    %734 = vmatpush2.xpose.msra.mxu0 0.0
    %735 = vmatprep.subr.mxu0 0.0
    %736 = vmatpush2.xpose.msra.mxu0 0.0
    %737 = vmatprep.subr.mxu0 0.0
    %738 = vmatpush2.xpose.msra.mxu0 0.0
    %739 = vmatprep.subr.mxu0 0.0
    %740 = vmatpush2.xpose.msra.mxu0 0.0
    %741 = vmatprep.subr.mxu0 0.0
    %742 = vmatpush2.xpose.msra.mxu0 0.0
    %743 = vmatprep.subr.mxu0 0.0
    %744 = vmatpush2.xpose.msra.mxu0 0.0
    %745 = vmatprep.subr.mxu0 0.0
    %746 = vmatpush2.xpose.msra.mxu0 0.0
    %747 = vmatprep.subr.mxu0 0.0
    %748 = vmatpush2.xpose.msra.mxu0 0.0
    %749 = vmatprep.subr.mxu0 0.0
    %750 = vmatpush2.xpose.msra.mxu0 0.0
    %751 = vmatprep.subr.mxu0 0.0
    %752 = vmatpush2.xpose.msra.mxu0 0.0
    %753 = vmatprep.subr.mxu0 0.0
    %754 = vmatpush2.xpose.msra.mxu0 0.0
    %755 = vmatprep.subr.mxu0 0.0
    %756 = vmatpush2.xpose.msra.mxu0 0.0
    %757 = vmatprep.subr.mxu0 0.0
    %758 = vmatpush2.xpose.msra.mxu0 0.0
    %759 = vmatprep.mubr.f32.mxu0 0.0
    %760 = vmatmul.mubr.f32.gmra.mxu0 %v150
    %v761 = vpop.f32.mrf.mxu0
    %v762 = vadd.f32 0.0, %v761
    %v763 = vpop.f32.mrf.mxu0
    %764 = vdwg.mxu0
    %v765 = vmax.f32 %v517, %v762
    %766 = vst [vmem:[#allocation2] sm:$0xff] %v765
    // Predicated region
    $region10: #{tpu_custom_call.1} parent=1 // pred_check
      _
    $region11: #{tpu_custom_call.1} parent=1 // pred_check_branch
      %768 = sbr.rel (0) target = $region13
    $region12: #{tpu_custom_call.1} parent=1 // pred_region
      %s770 = ssub.s32 128, 128
      %771 = vsyncadd [#allocation3], %s770
      %s773 = sshll.u32 [#allocation2], 4
      %s774 = int_to_ptr.vmem [resolvable:$true] %s773
      %776 = dma.vmem_to_hbm [thread:$0]  %s774, 128, %s2, [#allocation3]
    $region13: #{tpu_custom_call.1} parent=1 // pred_fallthru
      _
    // Predicated region
    $region14: #{tpu_custom_call.1} parent=1 // pred_check
      _
    $region15: #{tpu_custom_call.1} parent=1 // pred_check_branch
      %778 = sbr.rel (0) target = $region17
    $region16: #{tpu_custom_call.1} parent=1 // pred_region
      %779 = dma.done [#allocation3], 128
    $region17: #{tpu_custom_call.1} parent=1 // pred_fallthru
      _
    %780 = vsyncpa [#allocation3], 1

</llo_original>
